<compile_context>
chip_gen: v7x
topology: tpu7x:2x2x1
jax: 0.10.0
libtpu: 0.0.40
codegen_flags: <defaults>
</compile_context>

<pallas_src>
import functools

import jax
import jax.numpy as jnp
from jax.experimental import pallas as pl
from jax.experimental.pallas import tpu as pltpu


# ------------------------------------------------------------ param prep ----
def kaiming_uniform(key, out_features, in_features, dtype=jnp.float32):
    # torch.nn.init.kaiming_uniform_ default: a=0, fan_in, leaky_relu -> gain=sqrt(2)
    gain = jnp.sqrt(2.0)
    bound = gain * jnp.sqrt(3.0 / in_features)
    return jax.random.uniform(
        key, (out_features, in_features), dtype=dtype, minval=-bound, maxval=bound
    )


def trans_to_cir(weight, block_size):
    """JAX equivalent of CirMatrix.trans_to_cir (circulant-block averaging).

    Fully vectorized: the wrap-around diagonal mean is a single gather + mean.
    """
    out_f, in_f = weight.shape
    bs = block_size
    q, p = out_f // bs, in_f // bs
    tmp = weight.reshape(q, bs, p, bs).transpose(0, 2, 1, 3)  # (q, p, bs, bs)
    r = jnp.arange(bs)
    rr = r[:, None]   # row index  (bs, 1)
    ii = r[None, :]   # diag index (1, bs)
    # c[q,p,i] = mean over r of tmp[q,p,r,(r+i) % bs]
    gathered = tmp[:, :, rr, (rr + ii) % bs]      # (q, p, bs[r], bs[i])
    c = jnp.mean(gathered, axis=2)                # (q, p, bs)
    # circulant blocks: w[q,p,r,i] = c[q,p,(r-i) % bs]
    w_blk = c[:, :, (rr - ii) % bs]               # (q, p, bs, bs)
    return w_blk.transpose(0, 2, 1, 3).reshape(out_f, in_f)


def prepare_cir_output_weight(weight, *, block_size, cir, dtype=jnp.bfloat16):
    """Parameter-prep (NOT hot path): circulant transform + transpose + bf16."""
    w = trans_to_cir(weight, block_size) if cir else weight
    return w.T.astype(dtype)  # (K, H) so the kernel does x @ W^T as a plain matmul


# ---------------------------------------------------------------- kernel ----
def cir_output_kernel(x_ref, wt_ref, res_ref, gamma_ref, beta_ref, o_ref, *, eps):
    # x_ref: (tm, K) f32/bf16   wt_ref: (K, H) bf16   res_ref: (tm, H) any dtype
    # gamma/beta: (1, H) in the affine compute dtype (bf16 on v6e/v7x, f32 on v5e)
    x = x_ref[...]
    if x.dtype != wt_ref.dtype:
        x = x.astype(wt_ref.dtype)           # in-kernel cast: no extra HBM pass
    h = jnp.dot(x, wt_ref[...], preferred_element_type=jnp.float32)
    h = h + res_ref[...].astype(jnp.float32)
    # dropout: identity in inference mode
    # two-pass mean / variance in f32 (robust vs. E[h^2]-mean^2 cancellation)
    inv_h = 1.0 / h.shape[-1]
    mean = jnp.sum(h, axis=-1, keepdims=True) * inv_h
    centered = h - mean
    var = jnp.sum(centered * centered, axis=-1, keepdims=True) * inv_h
    normed = centered * jax.lax.rsqrt(var + eps)          # f32 (rsqrt rides EUP)
    # affine + cast in the (possibly low-precision) dtype of gamma/beta
    out = normed.astype(gamma_ref.dtype) * gamma_ref[...] + beta_ref[...]
    o_ref[...] = out.astype(o_ref.dtype)


def _round_up(a, b):
    return (a + b - 1) // b * b


def cir_output_forward(
    hidden_states,  # (B, S, intermediate_size)   activations (any float dtype)
    input_tensor,   # (B, S, hidden_size)         residual    (any float dtype)
    wt,             # (intermediate_size, hidden_size) prepped transposed weight (bf16)
    ln_gamma,       # (hidden_size,)
    ln_beta,        # (hidden_size,)
    *,
    eps=1e-12,
    tm=512,                        # v6e/v7x sweet spot; use 128-256 on v5e
    out_dtype=None,                # HBM-facing output dtype (default: residual dtype)
    affine_dtype=jnp.bfloat16,     # use jnp.float32 on v5e (no bf16 VALU)
    single_buffer_resident=True,   # Buffered(1) on weight/gamma/beta BlockSpecs
):
    B, S, K = hidden_states.shape
    K2, H = wt.shape
    assert K2 == K
    assert input_tensor.shape == (B, S, H)

    M = B * S
    x2 = hidden_states.reshape(M, K)       # no cast, no pad: zero extra HBM passes
    r2 = input_tensor.reshape(M, H)
    if out_dtype is None:
        out_dtype = input_tensor.dtype
    gamma2 = ln_gamma.reshape(1, H).astype(affine_dtype)   # tiny (H,) casts only
    beta2 = ln_beta.reshape(1, H).astype(affine_dtype)

    # M-tile: sublane aligned, capped to M; for small M make sure the grid has
    # >=2 steps so both v7x TensorCores get a tile (harmless on v5e/v6e).
    tm_eff = min(tm, _round_up(M, 8))
    if M > 8 and pl.cdiv(M, tm_eff) < 2:
        tm_eff = _round_up(pl.cdiv(M, 2), 8)
    grid = (pl.cdiv(M, tm_eff),)           # partial last block is masked on store

    # VMEM budget: computed from actual need (double-buffered streaming tiles,
    # single- or double-buffered resident weight) + headroom. Keeps headroom on
    # v7x's 64 MiB/TC and avoids tripping v5e's 16 MiB default scoped limit.
    def nbytes(shape, dt):
        n = 1
        for s in shape:
            n *= s
        return n * jnp.dtype(dt).itemsize

    w_bufs = 1 if single_buffer_resident else 2
    vmem_need = (
        2 * nbytes((tm_eff, K), x2.dtype)          # activation tiles
        + 2 * nbytes((tm_eff, H), r2.dtype)        # residual tiles
        + 2 * nbytes((tm_eff, H), out_dtype)       # output tiles
        + w_bufs * nbytes((K, H), wt.dtype)        # resident transposed weight
        + 2 * w_bufs * nbytes((1, H), affine_dtype)
        + 3 * nbytes((tm_eff, H), jnp.float32)     # f32 h / centered scratch
    )
    vmem_limit = int(vmem_need * 1.25) + (4 << 20)

    def build(use_single_buffer):
        resident = {"pipeline_mode": pl.Buffered(1)} if use_single_buffer else {}
        return pl.pallas_call(
            functools.partial(cir_output_kernel, eps=eps),
            out_shape=jax.ShapeDtypeStruct((M, H), out_dtype),
            grid_spec=pltpu.PrefetchScalarGridSpec(
                num_scalar_prefetch=0,
                grid=grid,
                in_specs=[
                    pl.BlockSpec((tm_eff, K), lambda i: (i, 0)),            # x tile
                    pl.BlockSpec((K, H), lambda i: (0, 0), **resident),     # weight
                    pl.BlockSpec((tm_eff, H), lambda i: (i, 0)),            # residual
                    pl.BlockSpec((1, H), lambda i: (0, 0), **resident),     # gamma
                    pl.BlockSpec((1, H), lambda i: (0, 0), **resident),     # beta
                ],
                out_specs=pl.BlockSpec((tm_eff, H), lambda i: (i, 0)),
            ),
            compiler_params=pltpu.CompilerParams(
                dimension_semantics=("parallel",),   # no-op on single-TC v5e/v6e
                vmem_limit_bytes=vmem_limit,
            ),
        )

    if single_buffer_resident:
        try:
            out = build(True)(x2, wt, r2, gamma2, beta2)
        except Exception:
            # Fallback if this JAX build rejects pipeline_mode=Buffered(1).
            out = build(False)(x2, wt, r2, gamma2, beta2)
    else:
        out = build(False)(x2, wt, r2, gamma2, beta2)

    return out.reshape(B, S, H)


# -------------------------------------------------------------- reference ---
def cir_output_reference(hidden_states, input_tensor, weight, gamma, beta,
                         *, block_size, cir, eps=1e-12, matmul_dtype=jnp.bfloat16):
    w = trans_to_cir(weight, block_size) if cir else weight
    h = jnp.einsum(
        "bsk,hk->bsh",
        hidden_states.astype(matmul_dtype),
        w.astype(matmul_dtype),
        preferred_element_type=jnp.float32,
    )
    h = h + input_tensor.astype(jnp.float32)
    mean = jnp.mean(h, axis=-1, keepdims=True)
    var = jnp.mean((h - mean) ** 2, axis=-1, keepdims=True)
    return (h - mean) * jax.lax.rsqrt(var + eps) * gamma + beta


# ------------------------------------------------------------------ main ----
if __name__ == "__main__":
    # Small demo config (K, H multiples of 128 -> lane-dense stores). M = 18 is
    # deliberately NOT a tile multiple so the run exercises a 2-step grid with a
    # masked partial last block (the production path for arbitrary B*S).
    # Real benchmarking should use K=3072/4096, H=768/1024, M in the thousands.
    B, S = 2, 9
    intermediate_size = 256
    hidden_size = 128
    block_size_output = 2
    cir_output = True
    layer_norm_eps = 1e-12
    # hidden_dropout_prob: dropout is identity at inference (no-op here)

    key = jax.random.PRNGKey(0)
    k_x, k_r, k_w = jax.random.split(key, 3)

    hidden_states = jax.random.normal(k_x, (B, S, intermediate_size), jnp.float32)
    # Residual from the previous layer is kept bf16 at the HBM boundary
    # (kernel upcasts to f32 for the add / LayerNorm math).
    input_tensor = jax.random.normal(
        k_r, (B, S, hidden_size), jnp.float32
    ).astype(jnp.bfloat16)

    # CirMatrix params (kaiming-uniform weight; bias exists but CirMatrix.forward
    # never uses it — it returns matmul(x, weight.t()) only).
    weight = kaiming_uniform(k_w, hidden_size, intermediate_size)
    ln_gamma = jnp.ones((hidden_size,), jnp.float32)
    ln_beta = jnp.zeros((hidden_size,), jnp.float32)

    # Parameter prep done once (outside hot path): circulant transform + W^T + bf16.
    wt = prepare_cir_output_weight(
        weight, block_size=block_size_output, cir=cir_output, dtype=jnp.bfloat16
    )

    out = cir_output_forward(
        hidden_states, input_tensor, wt, ln_gamma, ln_beta,
        eps=layer_norm_eps, tm=512, out_dtype=jnp.bfloat16,
        affine_dtype=jnp.bfloat16,
    )
    out = jax.block_until_ready(out)

    ref = cir_output_reference(
        hidden_states, input_tensor, weight, ln_gamma, ln_beta,
        block_size=block_size_output, cir=cir_output, eps=layer_norm_eps,
    )
    assert out.shape == (B, S, hidden_size)
    err = float(jnp.max(jnp.abs(out.astype(jnp.float32) - ref)))
    assert err < 3e-2, err

    print("KERNEL_OK")
</pallas_src>

<mosaic_0001>
module attributes {stable_mosaic.version = 11 : i64} {
  func.func @cir_output_kernel(%arg0: i32, %arg1: memref<16x256xf32, #tpu.memory_space<vmem>>, %arg2: memref<256x128xbf16, #tpu.memory_space<vmem>>, %arg3: memref<16x128xbf16, #tpu.memory_space<vmem>>, %arg4: memref<1x128xbf16, #tpu.memory_space<vmem>>, %arg5: memref<1x128xbf16, #tpu.memory_space<vmem>>, %arg6: memref<16x128xbf16, #tpu.memory_space<vmem>>) attributes {dimension_semantics = [#tpu.dimension_semantics<parallel>], iteration_bounds = array<i64: 2>, scalar_prefetch = 0 : i64, scratch_operands = 0 : i64, tpu.core_type = #tpu.core_type<tc>, window_params = [{transform_indices = @transform_0, window_bounds = array<i64: 16, 256>}, {pipeline_mode = #tpu.pipeline_mode<synchronous>, transform_indices = @transform_1, window_bounds = array<i64: 256, 128>}, {transform_indices = @transform_2, window_bounds = array<i64: 16, 128>}, {pipeline_mode = #tpu.pipeline_mode<synchronous>, transform_indices = @transform_3, window_bounds = array<i64: 1, 128>}, {pipeline_mode = #tpu.pipeline_mode<synchronous>, transform_indices = @transform_4, window_bounds = array<i64: 1, 128>}, {transform_indices = @transform_5, window_bounds = array<i64: 16, 128>}]} {
    %c0 = arith.constant 0 : index
    %c0_0 = arith.constant 0 : index
    %0 = vector.load %arg1[%c0, %c0_0] : memref<16x256xf32, #tpu.memory_space<vmem>>, vector<16x256xf32>
    %1 = arith.truncf %0 : vector<16x256xf32> to vector<16x256xbf16>
    %c0_1 = arith.constant 0 : index
    %c0_2 = arith.constant 0 : index
    %2 = vector.load %arg2[%c0_1, %c0_2] : memref<256x128xbf16, #tpu.memory_space<vmem>>, vector<256x128xbf16>
    %cst = arith.constant dense<0.000000e+00> : vector<16x128xf32>
    %3 = tpu.matmul %1, %2, %cst {dimension_numbers = #tpu.dot_dimension_numbers<[1], [0], [0], [1], [0, 0, 1, 1], [], []>} : vector<16x256xbf16>, vector<256x128xbf16>, vector<16x128xf32> -> vector<16x128xf32>
    %c0_3 = arith.constant 0 : index
    %c0_4 = arith.constant 0 : index
    %4 = vector.load %arg3[%c0_3, %c0_4] : memref<16x128xbf16, #tpu.memory_space<vmem>>, vector<16x128xbf16>
    %5 = arith.extf %4 : vector<16x128xbf16> to vector<16x128xf32>
    %6 = arith.addf %3, %5 : vector<16x128xf32>
    %cst_5 = arith.constant dense<0.000000e+00> : vector<16xf32>
    %7 = vector.multi_reduction <add>, %6, %cst_5 [1] : vector<16x128xf32> to vector<16xf32>
    %8 = vector.shape_cast %7 : vector<16xf32> to vector<16x1xf32>
    %cst_6 = arith.constant 7.812500e-03 : f32
    %9 = vector.broadcast %cst_6 : f32 to vector<16x1xf32>
    %10 = arith.mulf %8, %9 : vector<16x1xf32>
    %11 = vector.broadcast %10 : vector<16x1xf32> to vector<16x128xf32>
    %12 = arith.subf %6, %11 : vector<16x128xf32>
    %13 = arith.mulf %12, %12 : vector<16x128xf32>
    %cst_7 = arith.constant dense<0.000000e+00> : vector<16xf32>
    %14 = vector.multi_reduction <add>, %13, %cst_7 [1] : vector<16x128xf32> to vector<16xf32>
    %15 = vector.shape_cast %14 : vector<16xf32> to vector<16x1xf32>
    %cst_8 = arith.constant 7.812500e-03 : f32
    %16 = vector.broadcast %cst_8 : f32 to vector<16x1xf32>
    %17 = arith.mulf %15, %16 : vector<16x1xf32>
    %cst_9 = arith.constant 9.99999996E-13 : f32
    %18 = vector.broadcast %cst_9 : f32 to vector<16x1xf32>
    %19 = arith.addf %17, %18 : vector<16x1xf32>
    %20 = math.rsqrt %19 : vector<16x1xf32>
    %21 = vector.broadcast %20 : vector<16x1xf32> to vector<16x128xf32>
    %22 = arith.mulf %12, %21 : vector<16x128xf32>
    %23 = arith.truncf %22 : vector<16x128xf32> to vector<16x128xbf16>
    %c0_10 = arith.constant 0 : index
    %c0_11 = arith.constant 0 : index
    %24 = vector.load %arg4[%c0_10, %c0_11] : memref<1x128xbf16, #tpu.memory_space<vmem>>, vector<1x128xbf16>
    %25 = vector.broadcast %24 : vector<1x128xbf16> to vector<16x128xbf16>
    %26 = arith.mulf %23, %25 : vector<16x128xbf16>
    %c0_12 = arith.constant 0 : index
    %c0_13 = arith.constant 0 : index
    %27 = vector.load %arg5[%c0_12, %c0_13] : memref<1x128xbf16, #tpu.memory_space<vmem>>, vector<1x128xbf16>
    %28 = vector.broadcast %27 : vector<1x128xbf16> to vector<16x128xbf16>
    %29 = arith.addf %26, %28 : vector<16x128xbf16>
    %c0_14 = arith.constant 0 : index
    %c0_15 = arith.constant 0 : index
    %30 = vector.load %arg6[%c0_14, %c0_15] : memref<16x128xbf16, #tpu.memory_space<vmem>>, vector<16x128xbf16>
    tpu.vector_store %arg6[%c0_14, %c0_15], %29 {strides = array<i32>} : memref<16x128xbf16, #tpu.memory_space<vmem>>, vector<16x128xbf16>,
    return
  }
  func.func @transform_0(%arg0: i32) -> (i32, i32) {
    %c0_i32 = arith.constant 0 : i32
    %c0_i32_0 = arith.constant 0 : i32
    return %arg0, %c0_i32 : i32, i32
  }
  func.func @transform_1(%arg0: i32) -> (i32, i32) {
    %c0_i32 = arith.constant 0 : i32
    %c0_i32_0 = arith.constant 0 : i32
    %c0_i32_1 = arith.constant 0 : i32
    return %c0_i32, %c0_i32_0 : i32, i32
  }
  func.func @transform_2(%arg0: i32) -> (i32, i32) {
    %c0_i32 = arith.constant 0 : i32
    %c0_i32_0 = arith.constant 0 : i32
    return %arg0, %c0_i32 : i32, i32
  }
  func.func @transform_3(%arg0: i32) -> (i32, i32) {
    %c0_i32 = arith.constant 0 : i32
    %c0_i32_0 = arith.constant 0 : i32
    %c0_i32_1 = arith.constant 0 : i32
    return %c0_i32, %c0_i32_0 : i32, i32
  }
  func.func @transform_4(%arg0: i32) -> (i32, i32) {
    %c0_i32 = arith.constant 0 : i32
    %c0_i32_0 = arith.constant 0 : i32
    %c0_i32_1 = arith.constant 0 : i32
    return %c0_i32, %c0_i32_0 : i32, i32
  }
  func.func @transform_5(%arg0: i32) -> (i32, i32) {
    %c0_i32 = arith.constant 0 : i32
    %c0_i32_0 = arith.constant 0 : i32
    return %arg0, %c0_i32 : i32, i32
  }
}

module attributes {stable_mosaic.version = 11 : i64} {
  func.func @cir_output_kernel(%arg0: i32, %arg1: memref<16x256xf32, #tpu.memory_space<vmem>>, %arg2: memref<256x128xbf16, #tpu.memory_space<vmem>>, %arg3: memref<16x128xbf16, #tpu.memory_space<vmem>>, %arg4: memref<1x128xbf16, #tpu.memory_space<vmem>>, %arg5: memref<1x128xbf16, #tpu.memory_space<vmem>>, %arg6: memref<16x128xbf16, #tpu.memory_space<vmem>>) attributes {dimension_semantics = [#tpu.dimension_semantics<parallel>], iteration_bounds = array<i64: 2>, scalar_prefetch = 0 : i64, scratch_operands = 0 : i64, tpu.core_type = #tpu.core_type<tc>, window_params = [{transform_indices = @transform_0, window_bounds = array<i64: 16, 256>}, {pipeline_mode = #tpu.pipeline_mode<synchronous>, transform_indices = @transform_1, window_bounds = array<i64: 256, 128>}, {transform_indices = @transform_2, window_bounds = array<i64: 16, 128>}, {pipeline_mode = #tpu.pipeline_mode<synchronous>, transform_indices = @transform_3, window_bounds = array<i64: 1, 128>}, {pipeline_mode = #tpu.pipeline_mode<synchronous>, transform_indices = @transform_4, window_bounds = array<i64: 1, 128>}, {transform_indices = @transform_5, window_bounds = array<i64: 16, 128>}]} {
    %c0 = arith.constant 0 : index
    %c0_0 = arith.constant 0 : index
    %0 = vector.load %arg1[%c0, %c0_0] : memref<16x256xf32, #tpu.memory_space<vmem>>, vector<16x256xf32>
    %1 = arith.truncf %0 : vector<16x256xf32> to vector<16x256xbf16>
    %c0_1 = arith.constant 0 : index
    %c0_2 = arith.constant 0 : index
    %2 = vector.load %arg2[%c0_1, %c0_2] : memref<256x128xbf16, #tpu.memory_space<vmem>>, vector<256x128xbf16>
    %cst = arith.constant dense<0.000000e+00> : vector<16x128xf32>
    %3 = tpu.matmul %1, %2, %cst {dimension_numbers = #tpu.dot_dimension_numbers<[1], [0], [0], [1], [0, 0, 1, 1], [], []>} : vector<16x256xbf16>, vector<256x128xbf16>, vector<16x128xf32> -> vector<16x128xf32>
    %c0_3 = arith.constant 0 : index
    %c0_4 = arith.constant 0 : index
    %4 = vector.load %arg3[%c0_3, %c0_4] : memref<16x128xbf16, #tpu.memory_space<vmem>>, vector<16x128xbf16>
    %5 = arith.extf %4 : vector<16x128xbf16> to vector<16x128xf32>
    %6 = arith.addf %3, %5 : vector<16x128xf32>
    %cst_5 = arith.constant dense<0.000000e+00> : vector<16xf32>
    %7 = vector.multi_reduction <add>, %6, %cst_5 [1] : vector<16x128xf32> to vector<16xf32>
    %8 = vector.shape_cast %7 : vector<16xf32> to vector<16x1xf32>
    %cst_6 = arith.constant 7.812500e-03 : f32
    %9 = vector.broadcast %cst_6 : f32 to vector<16x1xf32>
    %10 = arith.mulf %8, %9 : vector<16x1xf32>
    %11 = vector.broadcast %10 : vector<16x1xf32> to vector<16x128xf32>
    %12 = arith.subf %6, %11 : vector<16x128xf32>
    %13 = arith.mulf %12, %12 : vector<16x128xf32>
    %cst_7 = arith.constant dense<0.000000e+00> : vector<16xf32>
    %14 = vector.multi_reduction <add>, %13, %cst_7 [1] : vector<16x128xf32> to vector<16xf32>
    %15 = vector.shape_cast %14 : vector<16xf32> to vector<16x1xf32>
    %cst_8 = arith.constant 7.812500e-03 : f32
    %16 = vector.broadcast %cst_8 : f32 to vector<16x1xf32>
    %17 = arith.mulf %15, %16 : vector<16x1xf32>
    %cst_9 = arith.constant 9.99999996E-13 : f32
    %18 = vector.broadcast %cst_9 : f32 to vector<16x1xf32>
    %19 = arith.addf %17, %18 : vector<16x1xf32>
    %20 = math.rsqrt %19 : vector<16x1xf32>
    %21 = vector.broadcast %20 : vector<16x1xf32> to vector<16x128xf32>
    %22 = arith.mulf %12, %21 : vector<16x128xf32>
    %23 = arith.truncf %22 : vector<16x128xf32> to vector<16x128xbf16>
    %c0_10 = arith.constant 0 : index
    %c0_11 = arith.constant 0 : index
    %24 = vector.load %arg4[%c0_10, %c0_11] : memref<1x128xbf16, #tpu.memory_space<vmem>>, vector<1x128xbf16>
    %25 = vector.broadcast %24 : vector<1x128xbf16> to vector<16x128xbf16>
    %26 = arith.mulf %23, %25 : vector<16x128xbf16>
    %c0_12 = arith.constant 0 : index
    %c0_13 = arith.constant 0 : index
    %27 = vector.load %arg5[%c0_12, %c0_13] : memref<1x128xbf16, #tpu.memory_space<vmem>>, vector<1x128xbf16>
    %28 = vector.broadcast %27 : vector<1x128xbf16> to vector<16x128xbf16>
    %29 = arith.addf %26, %28 : vector<16x128xbf16>
    %c0_14 = arith.constant 0 : index
    %c0_15 = arith.constant 0 : index
    %30 = vector.load %arg6[%c0_14, %c0_15] : memref<16x128xbf16, #tpu.memory_space<vmem>>, vector<16x128xbf16>
    tpu.vector_store %arg6[%c0_14, %c0_15], %29 {strides = array<i32>} : memref<16x128xbf16, #tpu.memory_space<vmem>>, vector<16x128xbf16>,
    return
  }
  func.func @transform_0(%arg0: i32) -> (i32, i32) {
    %c0_i32 = arith.constant 0 : i32
    %c0_i32_0 = arith.constant 0 : i32
    return %arg0, %c0_i32 : i32, i32
  }
  func.func @transform_1(%arg0: i32) -> (i32, i32) {
    %c0_i32 = arith.constant 0 : i32
    %c0_i32_0 = arith.constant 0 : i32
    %c0_i32_1 = arith.constant 0 : i32
    return %c0_i32, %c0_i32_0 : i32, i32
  }
  func.func @transform_2(%arg0: i32) -> (i32, i32) {
    %c0_i32 = arith.constant 0 : i32
    %c0_i32_0 = arith.constant 0 : i32
    return %arg0, %c0_i32 : i32, i32
  }
  func.func @transform_3(%arg0: i32) -> (i32, i32) {
    %c0_i32 = arith.constant 0 : i32
    %c0_i32_0 = arith.constant 0 : i32
    %c0_i32_1 = arith.constant 0 : i32
    return %c0_i32, %c0_i32_0 : i32, i32
  }
  func.func @transform_4(%arg0: i32) -> (i32, i32) {
    %c0_i32 = arith.constant 0 : i32
    %c0_i32_0 = arith.constant 0 : i32
    %c0_i32_1 = arith.constant 0 : i32
    return %c0_i32, %c0_i32_0 : i32, i32
  }
  func.func @transform_5(%arg0: i32) -> (i32, i32) {
    %c0_i32 = arith.constant 0 : i32
    %c0_i32_0 = arith.constant 0 : i32
    return %arg0, %c0_i32 : i32, i32
  }
}

</mosaic_0001>

<llo_original>
// kernel: tpu_custom_call.1
$region0: #{tpu_custom_call.1}
  #allocation0 [shape = 'u32[]', space=smem, size = 0x4, offset = 0x4, fixed_abs, tag = 'smem constant byte address 0x4 - core index']
  #allocation1 [shape = 'u32[144,128]{1,0:T(1,128)}', space=vmem, size = 0x12000, scoped, tag = 'internal scratch']
  %s0 = inlined_call_operand.hbm [shape: f32[18,256], index: 0, kind: input, shape index: {}]
  %s1 = inlined_call_operand.hbm [shape: bf16[256,128], index: 1, kind: input, shape index: {}]
  %s2 = inlined_call_operand.hbm [shape: bf16[18,128], index: 2, kind: input, shape index: {}]
  %s3 = inlined_call_operand.vmem [shape: bf16[1,128], index: 3, kind: input, shape index: {}]
  %s4 = inlined_call_operand.vmem [shape: bf16[1,128], index: 4, kind: input, shape index: {}]
  %s5 = inlined_call_operand.hbm [shape: bf16[18,128], index: 5, kind: output, shape index: {}]
  %s6 = sld [smem:[#allocation0]]
  $region65: #{tpu_custom_call.1} parent=0
    _
  %s8 = ssub.s32 1, %s6
  %s9 = scalar_select 0, %s8, %s6
  $region1: #{tpu_custom_call.1} parent=0
    #allocation2 [shape = 'u8[32768]{0}', space=vmem, size = 0x8000, scoped, tag = 'input window, operand 0']
    #allocation3 [shape = 's32[2]{0}', space=sflag, size = 0x8, scoped, tag = 'scoped memory for tpu_custom_call.1']
    #allocation4 [shape = 's32[2]{0}', space=sflag, size = 0x8, scoped, tag = 'scoped memory for tpu_custom_call.1']
    #allocation5 [shape = 'u8[65536]{0}', space=vmem, size = 0x10000, scoped, tag = 'input window, operand 1, single buffered']
    #allocation6 [shape = 's32[1]{0}', space=sflag, size = 0x4, scoped, tag = 'scoped memory for tpu_custom_call.1']
    #allocation7 [shape = 'u8[8192]{0}', space=vmem, size = 0x2000, scoped, tag = 'input window, operand 2']
    #allocation8 [shape = 'u8[8192]{0}', space=vmem, size = 0x2000, scoped, tag = 'output window, operand 0']
    %10 = vsyncpa [#allocation3], 0
    %s11 = scalar_lea.sflag [#allocation3], 1
    %12 = vsyncpa %s11, 0
    %13 = vsyncpa [#allocation6], 0
    %14 = vsyncpa [#allocation4], 0
    %s15 = scalar_lea.sflag [#allocation4], 1
    %16 = vsyncpa %s15, 0
    loop: start=0, step=1, limit=4
    $region2: #{tpu_custom_call.1} parent=1 // loop_pre_header
      _
    $region3: #{tpu_custom_call.1} parent=1 // loop_header
      %s18 = sphi 0, %s22
      %p19 = scmp.ge.s32.totalorder %s18, 4
      %s28 = sphi 0, %s30
      %s31 = sphi 0, %s28
      %s32 = sphi 0, %s31
      %s48 = sphi 0, %s32
      %s52 = sphi 0, %s52
      %s54 = sphi 0, %s52
      %s55 = sphi 0, %s54
      %s69 = sphi 0, %s55
      %s75 = sphi 0, %s77
      %s78 = sphi 0, %s75
      %s79 = sphi 0, %s78
      %s95 = sphi 0, %s79
      %s99 = sphi 0, %s99
      %s101 = sphi 0, %s99
      %s102 = sphi 0, %s101
      %s116 = sphi 0, %s102
      %s120 = sphi 0, %s120
      %s122 = sphi 0, %s120
      %s123 = sphi 0, %s122
      %s137 = sphi 0, %s123
      %s143 = sphi 0, %s145
      %s146 = sphi 0, %s143
      %s147 = sphi 0, %s146
      %s163 = sphi 0, %s147
    $region4: #{tpu_custom_call.1} parent=1 // loop_header_branch
      %21 = sbr.rel (%p19) target = $region8
    $region5: #{tpu_custom_call.1} parent=1 // loop_body
      %s23 = ssub.s32 %s18, 1
      %s24 = ssub.s32 %s18, 2
      %s25 = sadd.s32 %s18, 1
      %s26 = ssub.s32 %s18, %s25
      %p27 = scmp.eq.s32.totalorder %s26, 0
      %s29 = sadd.s32 %s28, 1
      %s30 = scalar_select %p27, %s28, %s29
      %p33 = pneg %p27
      %p34 = scmp.eq.s32.totalorder %s18, 1
      %p35 = por %p33, %p34
      %p36 = scmp.ne.s32.totalorder %s28, %s31
      %p37 = scmp.eq.s32.totalorder %s18, 0
      %p38 = por %p36, %p37
      %p39 = scmp.ne.s32.totalorder %s28, %s31
      %p40 = scmp.eq.s32.totalorder %s23, 1
      %p41 = por %p39, %p40
      %p42 = scmp.ne.s32.totalorder %s31, %s32
      %p43 = scmp.eq.s32.totalorder %s23, 0
      %p44 = por %p42, %p43
      %p45 = scmp.ne.s32.totalorder %s31, %s32
      %p46 = scmp.eq.s32.totalorder %s24, 1
      %p47 = por %p45, %p46
      %p49 = scmp.ne.s32.totalorder %s32, %s48
      %p50 = scmp.eq.s32.totalorder %s24, 0
      %p51 = por %p49, %p50
      %s53 = sadd.s32 %s52, 1
      %p56 = scmp.eq.s32.totalorder %s18, 1
      %p57 = scmp.ne.s32.totalorder %s52, %s54
      %p58 = scmp.eq.s32.totalorder %s18, 0
      %p59 = por %p57, %p58
      %p60 = scmp.ne.s32.totalorder %s52, %s54
      %p61 = scmp.eq.s32.totalorder %s23, 1
      %p62 = por %p60, %p61
      %p63 = scmp.ne.s32.totalorder %s54, %s55
      %p64 = scmp.eq.s32.totalorder %s23, 0
      %p65 = por %p63, %p64
      %p66 = scmp.ne.s32.totalorder %s54, %s55
      %p67 = scmp.eq.s32.totalorder %s24, 1
      %p68 = por %p66, %p67
      %p70 = scmp.ne.s32.totalorder %s55, %s69
      %p71 = scmp.eq.s32.totalorder %s24, 0
      %p72 = por %p70, %p71
      %s73 = ssub.s32 %s18, %s25
      %p74 = scmp.eq.s32.totalorder %s73, 0
      %s76 = sadd.s32 %s75, 1
      %s77 = scalar_select %p74, %s75, %s76
      %p80 = pneg %p74
      %p81 = scmp.eq.s32.totalorder %s18, 1
      %p82 = por %p80, %p81
      %p83 = scmp.ne.s32.totalorder %s75, %s78
      %p84 = scmp.eq.s32.totalorder %s18, 0
      %p85 = por %p83, %p84
      %p86 = scmp.ne.s32.totalorder %s75, %s78
      %p87 = scmp.eq.s32.totalorder %s23, 1
      %p88 = por %p86, %p87
      %p89 = scmp.ne.s32.totalorder %s78, %s79
      %p90 = scmp.eq.s32.totalorder %s23, 0
      %p91 = por %p89, %p90
      %p92 = scmp.ne.s32.totalorder %s78, %s79
      %p93 = scmp.eq.s32.totalorder %s24, 1
      %p94 = por %p92, %p93
      %p96 = scmp.ne.s32.totalorder %s79, %s95
      %p97 = scmp.eq.s32.totalorder %s24, 0
      %p98 = por %p96, %p97
      %s100 = sadd.s32 %s99, 1
      %p103 = scmp.eq.s32.totalorder %s18, 1
      %p104 = scmp.ne.s32.totalorder %s99, %s101
      %p105 = scmp.eq.s32.totalorder %s18, 0
      %p106 = por %p104, %p105
      %p107 = scmp.ne.s32.totalorder %s99, %s101
      %p108 = scmp.eq.s32.totalorder %s23, 1
      %p109 = por %p107, %p108
      %p110 = scmp.ne.s32.totalorder %s101, %s102
      %p111 = scmp.eq.s32.totalorder %s23, 0
      %p112 = por %p110, %p111
      %p113 = scmp.ne.s32.totalorder %s101, %s102
      %p114 = scmp.eq.s32.totalorder %s24, 1
      %p115 = por %p113, %p114
      %p117 = scmp.ne.s32.totalorder %s102, %s116
      %p118 = scmp.eq.s32.totalorder %s24, 0
      %p119 = por %p117, %p118
      %s121 = sadd.s32 %s120, 1
      %p124 = scmp.eq.s32.totalorder %s18, 1
      %p125 = scmp.ne.s32.totalorder %s120, %s122
      %p126 = scmp.eq.s32.totalorder %s18, 0
      %p127 = por %p125, %p126
      %p128 = scmp.ne.s32.totalorder %s120, %s122
      %p129 = scmp.eq.s32.totalorder %s23, 1
      %p130 = por %p128, %p129
      %p131 = scmp.ne.s32.totalorder %s122, %s123
      %p132 = scmp.eq.s32.totalorder %s23, 0
      %p133 = por %p131, %p132
      %p134 = scmp.ne.s32.totalorder %s122, %s123
      %p135 = scmp.eq.s32.totalorder %s24, 1
      %p136 = por %p134, %p135
      %p138 = scmp.ne.s32.totalorder %s123, %s137
      %p139 = scmp.eq.s32.totalorder %s24, 0
      %p140 = por %p138, %p139
      %s141 = ssub.s32 %s18, %s25
      %p142 = scmp.eq.s32.totalorder %s141, 0
      %s144 = sadd.s32 %s143, 1
      %s145 = scalar_select %p142, %s143, %s144
      %p148 = pneg %p142
      %p149 = scmp.eq.s32.totalorder %s18, 1
      %p150 = por %p148, %p149
      %p151 = scmp.ne.s32.totalorder %s143, %s146
      %p152 = scmp.eq.s32.totalorder %s18, 0
      %p153 = por %p151, %p152
      %p154 = scmp.ne.s32.totalorder %s143, %s146
      %p155 = scmp.eq.s32.totalorder %s23, 1
      %p156 = por %p154, %p155
      %p157 = scmp.ne.s32.totalorder %s146, %s147
      %p158 = scmp.eq.s32.totalorder %s23, 0
      %p159 = por %p157, %p158
      %p160 = scmp.ne.s32.totalorder %s146, %s147
      %p161 = scmp.eq.s32.totalorder %s24, 1
      %p162 = por %p160, %p161
      %p164 = scmp.ne.s32.totalorder %s147, %s163
      %p165 = scmp.eq.s32.totalorder %s24, 0
      %p166 = por %p164, %p165
      %p167 = scmp.le.s32.totalorder 1, %s18
      %p168 = scmp.lt.s32.totalorder %s18, 3
      %p169 = pnand %p167, %p168
      %p170 = pneg %p169
      // Predicated region
      $region9: #{tpu_custom_call.1} parent=5 // pred_check
        _
      $region10: #{tpu_custom_call.1} parent=5 // pred_check_branch
        %172 = sbr.rel (%p169) target = $region12
      $region11: #{tpu_custom_call.1} parent=5 // pred_region
        %s173 = ssub.s32 %s18, 1
        // Predicated region
        $region13: #{tpu_custom_call.1} parent=11 // pred_check
          %p174 = pneg %p65
        $region14: #{tpu_custom_call.1} parent=11 // pred_check_branch
          %176 = sbr.rel (%p174) target = $region16
        $region15: #{tpu_custom_call.1} parent=11 // pred_region
          %s178 = ssub.s32 2048, 2048
          %179 = vsyncadd [#allocation6], %s178
          %s180 = sshll.u32 [#allocation5], 4
          %s181 = int_to_ptr.vmem [resolvable:$true] %s180
          %186 = dma.hbm_to_vmem [thread:$0]  %s1, 2048, %s181, [#allocation6], 64, 64, 4
        $region16: #{tpu_custom_call.1} parent=11 // pred_fallthru
          _
        // Predicated region
        $region17: #{tpu_custom_call.1} parent=11 // pred_check
          %p187 = pneg %p112
        $region18: #{tpu_custom_call.1} parent=11 // pred_check_branch
          %189 = sbr.rel (%p187) target = $region20
        $region19: #{tpu_custom_call.1} parent=11 // pred_region
          _
        $region20: #{tpu_custom_call.1} parent=11 // pred_fallthru
          _
        // Predicated region
        $region21: #{tpu_custom_call.1} parent=11 // pred_check
          %p190 = pneg %p133
        $region22: #{tpu_custom_call.1} parent=11 // pred_check_branch
          %192 = sbr.rel (%p190) target = $region24
        $region23: #{tpu_custom_call.1} parent=11 // pred_region
          _
        $region24: #{tpu_custom_call.1} parent=11 // pred_fallthru
          _
      $region12: #{tpu_custom_call.1} parent=5 // pred_fallthru
        _
      %p193 = scmp.lt.s32.totalorder %s18, 2
      // Predicated region
      $region25: #{tpu_custom_call.1} parent=5 // pred_check
        %p194 = pneg %p193
      $region26: #{tpu_custom_call.1} parent=5 // pred_check_branch
        %196 = sbr.rel (%p194) target = $region28
      $region27: #{tpu_custom_call.1} parent=5 // pred_region
        // Predicated region
        $region29: #{tpu_custom_call.1} parent=27 // pred_check
          %p197 = pneg %p38
        $region30: #{tpu_custom_call.1} parent=27 // pred_check_branch
          %199 = sbr.rel (%p197) target = $region32
        $region31: #{tpu_custom_call.1} parent=27 // pred_region
          %s200 = sand.u32 %s18, 1
          %s201 = scalar_lea.sflag [#allocation3], %s200
          %s202 = sand.u32 %s28, 1
          %s203 = smul.addr %s202, 32
          %s204 = scalar_lea.vmem [#allocation2], %s203
          %s205 = smul.u32 2, %s18
          %s206 = ssub.s32 3, %s205
          %p207 = scmp.lt.s32.totalorder %s206, 2
          %s208 = scalar_select %p207, %s206, 2
          %s209 = smul.u32 128, %s208
          %s210 = smul.u32 %s209, 2
          %s212 = ssub.s32 512, %s210
          %213 = vsyncadd %s201, %s212
          %p214 = scmp.ne.s32.totalorder 0, %s210
          %s215 = smul.addr %s205, 2
          %s216 = smul.addr %s215, 128
          %s217 = scalar_lea.hbm %s0, %s216
          %s218 = smul.u32 16, %s208
          %s219 = sshll.u32 %s204, 4
          %s220 = int_to_ptr.vmem [resolvable:$true] %s219
          %s221 = sshll.u32 %s218, 4
          %225 = dma.hbm_to_vmem [thread:$0]  (%p214), %s217, %s221, %s220, %s201, 256, 256, 16
        $region32: #{tpu_custom_call.1} parent=27 // pred_fallthru
          _
        // Predicated region
        $region33: #{tpu_custom_call.1} parent=27 // pred_check
          %p226 = pneg %p85
        $region34: #{tpu_custom_call.1} parent=27 // pred_check_branch
          %228 = sbr.rel (%p226) target = $region36
        $region35: #{tpu_custom_call.1} parent=27 // pred_region
          %s229 = sand.u32 %s18, 1
          %s230 = scalar_lea.sflag [#allocation3], %s229
          %s231 = sand.u32 %s75, 1
          %s232 = smul.addr %s231, 8
          %s233 = scalar_lea.vmem [#allocation7], %s232
          %s234 = smul.u32 2, %s18
          %s235 = ssub.s32 3, %s234
          %p236 = scmp.lt.s32.totalorder %s235, 2
          %s237 = scalar_select %p236, %s235, 2
          %s238 = smul.u32 64, %s237
          %s240 = ssub.s32 128, %s238
          %241 = vsyncadd %s230, %s240
          %p242 = scmp.ne.s32.totalorder 0, %s238
          %s243 = smul.addr %s234, 64
          %s244 = scalar_lea.hbm %s2, %s243
          %s245 = smul.u32 4, %s237
          %s246 = sshll.u32 %s233, 4
          %s247 = int_to_ptr.vmem [resolvable:$true] %s246
          %s248 = sshll.u32 %s245, 4
          %252 = dma.hbm_to_vmem [thread:$0]  (%p242), %s244, %s248, %s247, %s230, 64, 64, 4
        $region36: #{tpu_custom_call.1} parent=27 // pred_fallthru
          _
      $region28: #{tpu_custom_call.1} parent=5 // pred_fallthru
        _
      %p253 = scmp.le.s32.totalorder 1, %s18
      %p254 = scmp.lt.s32.totalorder %s18, 3
      %p255 = pnand %p253, %p254
      %p256 = pneg %p255
      // Predicated region
      $region37: #{tpu_custom_call.1} parent=5 // pred_check
        _
      $region38: #{tpu_custom_call.1} parent=5 // pred_check_branch
        %258 = sbr.rel (%p255) target = $region40
      $region39: #{tpu_custom_call.1} parent=5 // pred_region
        %s259 = ssub.s32 %s18, 1
        %s260 = sand.u32 %s23, 1
        %s261 = scalar_lea.sflag [#allocation3], %s260
        %s262 = sand.u32 %s31, 1
        %s263 = smul.addr %s262, 32
        %s264 = scalar_lea.vmem [#allocation2], %s263
        // Predicated region
        $region41: #{tpu_custom_call.1} parent=39 // pred_check
          %p265 = pneg %p44
        $region42: #{tpu_custom_call.1} parent=39 // pred_check_branch
          %267 = sbr.rel (%p265) target = $region44
        $region43: #{tpu_custom_call.1} parent=39 // pred_region
          %268 = dma.done %s261, 512
        $region44: #{tpu_custom_call.1} parent=39 // pred_fallthru
          _
        // Predicated region
        $region45: #{tpu_custom_call.1} parent=39 // pred_check
          %p269 = pneg %p65
        $region46: #{tpu_custom_call.1} parent=39 // pred_check_branch
          %271 = sbr.rel (%p269) target = $region48
        $region47: #{tpu_custom_call.1} parent=39 // pred_region
          %272 = dma.done [#allocation6], 2048
        $region48: #{tpu_custom_call.1} parent=39 // pred_fallthru
          _
        %s273 = sand.u32 %s23, 1
        %s274 = scalar_lea.sflag [#allocation3], %s273
        %s275 = sand.u32 %s78, 1
        %s276 = smul.addr %s275, 8
        %s277 = scalar_lea.vmem [#allocation7], %s276
        // Predicated region
        $region49: #{tpu_custom_call.1} parent=39 // pred_check
          %p278 = pneg %p91
        $region50: #{tpu_custom_call.1} parent=39 // pred_check_branch
          %280 = sbr.rel (%p278) target = $region52
        $region51: #{tpu_custom_call.1} parent=39 // pred_region
          %281 = dma.done %s274, 128
        $region52: #{tpu_custom_call.1} parent=39 // pred_fallthru
          _
        %s282 = sand.u32 %s23, 1
        %s283 = scalar_lea.sflag [#allocation3], %s282
        %s284 = sand.u32 %s31, 1
        %s285 = smul.addr %s284, 32
        %s286 = scalar_lea.vmem [#allocation2], %s285
        %p287 = pneg %p44
        %p288 = pneg %p41
        %p289 = pneg %p65
        %p290 = pneg %p62
        %s291 = sand.u32 %s23, 1
        %s292 = scalar_lea.sflag [#allocation3], %s291
        %s293 = sand.u32 %s78, 1
        %s294 = smul.addr %s293, 8
        %s295 = scalar_lea.vmem [#allocation7], %s294
        %p296 = pneg %p91
        %p297 = pneg %p88
        %p298 = pneg %p112
        %p299 = pneg %p109
        %p300 = pneg %p133
        %p301 = pneg %p130
        %p302 = pneg %p159
        %p303 = pneg %p156
        %s304 = sand.u32 %s146, 1
        %s305 = scalar_lea.sflag [#allocation4], %s304
        %s306 = sand.u32 %s146, 1
        %s307 = smul.addr %s306, 8
        %s308 = scalar_lea.vmem [#allocation8], %s307
        %s309 = smul.u32 2, %s23
        %s310 = ssub.s32 3, %s309
        %p311 = scmp.lt.s32.totalorder %s310, 2
        %s312 = scalar_select %p311, %s310, 2
        %s313 = smul.u32 128, %s312
        %s314 = smul.u32 %s313, 2
        %s315 = smul.u32 2, %s23
        %s316 = ssub.s32 3, %s315
        %p317 = scmp.lt.s32.totalorder %s316, 2
        %s318 = scalar_select %p317, %s316, 2
        %s319 = smul.u32 64, %s318
        %s320 = smul.u32 2, %s23
        %s321 = ssub.s32 3, %s320
        %p322 = scmp.lt.s32.totalorder %s321, 2
        %s323 = scalar_select %p322, %s321, 2
        %s324 = smul.u32 64, %s323
        %v326 = vld [vmem:[%s264] sm:$0xff]
        %v327 = vld [vmem:[%s264 + $0x8] sm:$0xff]
        %v328 = vld [vmem:[%s264 + $0x10] sm:$0xff]
        %v329 = vld [vmem:[%s264 + $0x18] sm:$0xff]
        %v330 = vpack.c.bf16 %v328, %v326
        %v331 = vpack.c.bf16 %v329, %v327
        %v332 = vld [vmem:[#allocation5] sm:$0xf]
        %v333 = vld [vmem:[#allocation5 + $0x4] sm:$0xf]
        %v334 = vld [vmem:[#allocation5 + $0x8] sm:$0xf]
        %v335 = vld [vmem:[#allocation5 + $0xc] sm:$0xf]
        %v336 = vld [vmem:[#allocation5 + $0x10] sm:$0xf]
        %v337 = vld [vmem:[#allocation5 + $0x14] sm:$0xf]
        %v338 = vld [vmem:[#allocation5 + $0x18] sm:$0xf]
        %v339 = vld [vmem:[#allocation5 + $0x1c] sm:$0xf]
        %v340 = vld [vmem:[#allocation5 + $0x20] sm:$0xf]
        %v341 = vld [vmem:[#allocation5 + $0x24] sm:$0xf]
        %v342 = vld [vmem:[#allocation5 + $0x28] sm:$0xf]
        %v343 = vld [vmem:[#allocation5 + $0x2c] sm:$0xf]
        %v344 = vld [vmem:[#allocation5 + $0x30] sm:$0xf]
        %v345 = vld [vmem:[#allocation5 + $0x34] sm:$0xf]
        %v346 = vld [vmem:[#allocation5 + $0x38] sm:$0xf]
        %v347 = vld [vmem:[#allocation5 + $0x3c] sm:$0xf]
        %v348 = vld [vmem:[#allocation5 + $0x40] sm:$0xf]
        %v349 = vld [vmem:[#allocation5 + $0x44] sm:$0xf]
        %v350 = vld [vmem:[#allocation5 + $0x48] sm:$0xf]
        %v351 = vld [vmem:[#allocation5 + $0x4c] sm:$0xf]
        %v352 = vld [vmem:[#allocation5 + $0x50] sm:$0xf]
        %v353 = vld [vmem:[#allocation5 + $0x54] sm:$0xf]
        %v354 = vld [vmem:[#allocation5 + $0x58] sm:$0xf]
        %v355 = vld [vmem:[#allocation5 + $0x5c] sm:$0xf]
        %v356 = vld [vmem:[#allocation5 + $0x60] sm:$0xf]
        %v357 = vld [vmem:[#allocation5 + $0x64] sm:$0xf]
        %v358 = vld [vmem:[#allocation5 + $0x68] sm:$0xf]
        %v359 = vld [vmem:[#allocation5 + $0x6c] sm:$0xf]
        %v360 = vld [vmem:[#allocation5 + $0x70] sm:$0xf]
        %v361 = vld [vmem:[#allocation5 + $0x74] sm:$0xf]
        %v362 = vld [vmem:[#allocation5 + $0x78] sm:$0xf]
        %v363 = vld [vmem:[#allocation5 + $0x7c] sm:$0xf]
        %v364 = vld [vmem:[%s277] sm:$0xf]
        %v365 = vld [vmem:[%s277 + $0x4] sm:$0xf]
        %v366 = vunpack.c.l.bf16 %v364
        %v367 = vunpack.c.l.bf16 %v365
        %v400 = vunpack.c.l.b16 %v332
        %v401 = vunpack.c.l.b16 %v333
        %v402 = vunpack.c.l.b16 %v334
        %v403 = vunpack.c.l.b16 %v335
        %v404 = vunpack.c.l.b16 %v336
        %v405 = vunpack.c.l.b16 %v337
        %v406 = vunpack.c.l.b16 %v338
        %v407 = vunpack.c.l.b16 %v339
        %v408 = vunpack.c.l.b16 %v340
        %v409 = vunpack.c.l.b16 %v341
        %v410 = vunpack.c.l.b16 %v342
        %v411 = vunpack.c.l.b16 %v343
        %v412 = vunpack.c.l.b16 %v344
        %v413 = vunpack.c.l.b16 %v345
        %v414 = vunpack.c.l.b16 %v346
        %v415 = vunpack.c.l.b16 %v347
        %v416 = vunpack.c.l.b16 %v348
        %v417 = vunpack.c.l.b16 %v349
        %v418 = vunpack.c.l.b16 %v350
        %v419 = vunpack.c.l.b16 %v351
        %v420 = vunpack.c.l.b16 %v352
        %v421 = vunpack.c.l.b16 %v353
        %v422 = vunpack.c.l.b16 %v354
        %v423 = vunpack.c.l.b16 %v355
        %v424 = vunpack.c.l.b16 %v356
        %v425 = vunpack.c.l.b16 %v357
        %v426 = vunpack.c.l.b16 %v358
        %v427 = vunpack.c.l.b16 %v359
        %v428 = vunpack.c.l.b16 %v360
        %v429 = vunpack.c.l.b16 %v361
        %v430 = vunpack.c.l.b16 %v362
        %v431 = vunpack.c.l.b16 %v363
        %v432 = vpack.c.b16 %v401, %v400
        %v433 = vpack.c.b16 %v403, %v402
        %v434 = vpack.c.b16 %v405, %v404
        %v435 = vpack.c.b16 %v407, %v406
        %v436 = vpack.c.b16 %v409, %v408
        %v437 = vpack.c.b16 %v411, %v410
        %v438 = vpack.c.b16 %v413, %v412
        %v439 = vpack.c.b16 %v415, %v414
        %v440 = vpack.c.b16 %v417, %v416
        %v441 = vpack.c.b16 %v419, %v418
        %v442 = vpack.c.b16 %v421, %v420
        %v443 = vpack.c.b16 %v423, %v422
        %v444 = vpack.c.b16 %v425, %v424
        %v445 = vpack.c.b16 %v427, %v426
        %v446 = vpack.c.b16 %v429, %v428
        %v447 = vpack.c.b16 %v431, %v430
        %464 = vmatprep.subr.bf16.mxu0 0
        %465 = vmatpush1.bf16.msra.mxu0 %v432
        %466 = vmatprep.subr.bf16.mxu0 0
        %467 = vmatpush1.bf16.msra.mxu0 %v433
        %468 = vmatprep.subr.bf16.mxu0 0
        %469 = vmatpush1.bf16.msra.mxu0 %v434
        %470 = vmatprep.subr.bf16.mxu0 0
        %471 = vmatpush1.bf16.msra.mxu0 %v435
        %472 = vmatprep.subr.bf16.mxu0 0
        %473 = vmatpush1.bf16.msra.mxu0 %v436
        %474 = vmatprep.subr.bf16.mxu0 0
        %475 = vmatpush1.bf16.msra.mxu0 %v437
        %476 = vmatprep.subr.bf16.mxu0 0
        %477 = vmatpush1.bf16.msra.mxu0 %v438
        %478 = vmatprep.subr.bf16.mxu0 0
        %479 = vmatpush1.bf16.msra.mxu0 %v439
        %480 = vmatprep.subr.bf16.mxu0 0
        %481 = vmatpush1.bf16.msra.mxu0 %v440
        %482 = vmatprep.subr.bf16.mxu0 0
        %483 = vmatpush1.bf16.msra.mxu0 %v441
        %484 = vmatprep.subr.bf16.mxu0 0
        %485 = vmatpush1.bf16.msra.mxu0 %v442
        %486 = vmatprep.subr.bf16.mxu0 0
        %487 = vmatpush1.bf16.msra.mxu0 %v443
        %488 = vmatprep.subr.bf16.mxu0 0
        %489 = vmatpush1.bf16.msra.mxu0 %v444
        %490 = vmatprep.subr.bf16.mxu0 0
        %491 = vmatpush1.bf16.msra.mxu0 %v445
        %492 = vmatprep.subr.bf16.mxu0 0
        %493 = vmatpush1.bf16.msra.mxu0 %v446
        %494 = vmatprep.subr.bf16.mxu0 0
        %495 = vmatpush1.bf16.msra.mxu0 %v447
        %496 = vmatprep.mubr.bf16.mxu0 %v331
        %497 = vmatmul.mubr.bf16.gmra.mrb[0].mxu0 %v330
        %v498 = vpop.f32.mrb[0].mxu0
        %v499 = vadd.f32 %v366, %v498
        %v500 = vpop.f32.mrb[0].mxu0
        %v501 = vpop.f32.mrb[0].mxu0
        %v502 = vadd.f32 %v367, %v501
        %v503 = vpop.f32.mrb[0].mxu0
        %504 = vdwg.mxu0
        %505 = vadd.xlane.f32.xlu0 %v499
        %v506 = vpop.xlane.xlu0 %505
        %507 = vadd.xlane.f32.xlu0 %v502
        %v508 = vpop.xlane.xlu0 %507
        %v509 = vmul.f32 %v506, 0.0078125
        %v510 = vmul.f32 %v508, 0.0078125
        %v511 = vsub.f32 %v499, %v509
        %v512 = vsub.f32 %v502, %v510
        %v513 = vmul.f32 %v511, %v511
        %v514 = vmul.f32 %v512, %v512
        %515 = vadd.xlane.f32.xlu0 %v513
        %v516 = vpop.xlane.xlu0 %515
        %517 = vadd.xlane.f32.xlu0 %v514
        %v518 = vpop.xlane.xlu0 %517
        %v519 = vmul.f32 %v516, 0.0078125
        %v520 = vmul.f32 %v518, 0.0078125
        %v521 = vadd.f32 %v519, 1e-12
        %v522 = vadd.f32 %v520, 1e-12
        %v523 = vrsqrt.pop %v521
        %v524 = vrsqrt.pop %v522
        %v525 = vmul.f32 %v511, %v523
        %v526 = vmul.f32 %v512, %v524
        %v527 = vpack.c.bf16 %v526, %v525
        %v528 = vld [vmem:[%s3] sm:$0x1]
        %v530 = vpack.i.b16 %v528, %v528
        %v532 = vlaneseq
        %v533 = vshrl.u32 %v532, 7
        %v534 = vsub.s32 0, %v533
        %v535 = vrot.slane %v530, %v534
        %v536 = vmul.bf16 %v527, %v535
        %v537 = vld [vmem:[%s4] sm:$0x1]
        %v539 = vpack.i.b16 %v537, %v537
        %v541 = vlaneseq
        %v542 = vshrl.u32 %v541, 7
        %v543 = vsub.s32 0, %v542
        %v544 = vrot.slane %v539, %v543
        %v545 = vadd.bf16 %v536, %v544
        %v547 = vunpack.c.l.b16 %v545
        %v548 = vunpack.c.h.b16 %v545
        %v549 = vpack.c.b16 %v547, %v547
        %v550 = vpack.c.b16 %v548, %v548
        %553 = vst [vmem:[%s308] sm:$0xf] %v549
        %554 = vst [vmem:[%s308 + $0x4] sm:$0xf] %v550
        %s555 = sand.u32 %s146, 1
        %s556 = scalar_lea.sflag [#allocation4], %s555
        %s557 = sand.u32 %s146, 1
        %s558 = smul.addr %s557, 8
        %s559 = scalar_lea.vmem [#allocation8], %s558
        // Predicated region
        $region53: #{tpu_custom_call.1} parent=39 // pred_check
          %p560 = pneg %p156
        $region54: #{tpu_custom_call.1} parent=39 // pred_check_branch
          %562 = sbr.rel (%p560) target = $region56
        $region55: #{tpu_custom_call.1} parent=39 // pred_region
          %s563 = smul.u32 2, %s23
          %s564 = ssub.s32 3, %s563
          %p565 = scmp.lt.s32.totalorder %s564, 2
          %s566 = scalar_select %p565, %s564, 2
          %s567 = smul.u32 64, %s566
          %s569 = ssub.s32 128, %s567
          %570 = vsyncadd %s556, %s569
          %p571 = scmp.ne.s32.totalorder 0, %s567
          %s572 = smul.addr %s563, 64
          %s573 = scalar_lea.hbm %s5, %s572
          %s574 = smul.u32 4, %s566
          %s575 = sshll.u32 %s559, 4
          %s576 = int_to_ptr.vmem [resolvable:$true] %s575
          %s577 = sshll.u32 %s574, 4
          %581 = dma.vmem_to_hbm [thread:$0]  (%p571), %s576, %s577, %s573, %s556, 64, 64, 4
        $region56: #{tpu_custom_call.1} parent=39 // pred_fallthru
          _
      $region40: #{tpu_custom_call.1} parent=5 // pred_fallthru
        _
      %p582 = scmp.le.s32.totalorder 2, %s18
      // Predicated region
      $region57: #{tpu_custom_call.1} parent=5 // pred_check
        %p583 = pneg %p582
      $region58: #{tpu_custom_call.1} parent=5 // pred_check_branch
        %585 = sbr.rel (%p583) target = $region60
      $region59: #{tpu_custom_call.1} parent=5 // pred_region
        %s586 = ssub.s32 %s18, 2
        // Predicated region
        $region61: #{tpu_custom_call.1} parent=59 // pred_check
          %p587 = pneg %p162
        $region62: #{tpu_custom_call.1} parent=59 // pred_check_branch
          %589 = sbr.rel (%p587) target = $region64
        $region63: #{tpu_custom_call.1} parent=59 // pred_region
          %s590 = sand.u32 %s147, 1
          %s591 = scalar_lea.sflag [#allocation4], %s590
          %s592 = sand.u32 %s147, 1
          %s593 = smul.addr %s592, 8
          %s594 = scalar_lea.vmem [#allocation8], %s593
          %595 = dma.done %s591, 128
        $region64: #{tpu_custom_call.1} parent=59 // pred_fallthru
          _
      $region60: #{tpu_custom_call.1} parent=5 // pred_fallthru
        _
    $region6: #{tpu_custom_call.1} parent=1 // loop_footer
      %s22 = sadd.s32 1, %s18
    $region7: #{tpu_custom_call.1} parent=1 // loop_footer_branch
      %17 = sbr.rel target = $region3
    $region8: #{tpu_custom_call.1} parent=1 // loop_exit
      _
    %596 = vsyncpa [#allocation3], 1
    %s597 = scalar_lea.sflag [#allocation3], 1
    %598 = vsyncpa %s597, 1
    %599 = vsyncpa [#allocation6], 1
    %600 = vsyncpa [#allocation4], 1
    %s601 = scalar_lea.sflag [#allocation4], 1
    %602 = vsyncpa %s601, 1

// kernel: tpu_custom_call.1
$region0: #{tpu_custom_call.1}
  #allocation0 [shape = 'u32[]', space=smem, size = 0x4, offset = 0x4, fixed_abs, tag = 'smem constant byte address 0x4 - core index']
  #allocation1 [shape = 'u32[144,128]{1,0:T(1,128)}', space=vmem, size = 0x12000, scoped, tag = 'internal scratch']
  %s0 = inlined_call_operand.hbm [shape: f32[18,256], index: 0, kind: input, shape index: {}]
  %s1 = inlined_call_operand.hbm [shape: bf16[256,128], index: 1, kind: input, shape index: {}]
  %s2 = inlined_call_operand.hbm [shape: bf16[18,128], index: 2, kind: input, shape index: {}]
  %s3 = inlined_call_operand.vmem [shape: bf16[1,128], index: 3, kind: input, shape index: {}]
  %s4 = inlined_call_operand.vmem [shape: bf16[1,128], index: 4, kind: input, shape index: {}]
  %s5 = inlined_call_operand.hbm [shape: bf16[18,128], index: 5, kind: output, shape index: {}]
  %s6 = sld [smem:[#allocation0]]
  $region65: #{tpu_custom_call.1} parent=0
    _
  %s8 = ssub.s32 1, %s6
  %s9 = scalar_select 0, %s8, %s6
  $region1: #{tpu_custom_call.1} parent=0
    #allocation2 [shape = 'u8[32768]{0}', space=vmem, size = 0x8000, scoped, tag = 'input window, operand 0']
    #allocation3 [shape = 's32[2]{0}', space=sflag, size = 0x8, scoped, tag = 'scoped memory for tpu_custom_call.1']
    #allocation4 [shape = 's32[2]{0}', space=sflag, size = 0x8, scoped, tag = 'scoped memory for tpu_custom_call.1']
    #allocation5 [shape = 'u8[65536]{0}', space=vmem, size = 0x10000, scoped, tag = 'input window, operand 1, single buffered']
    #allocation6 [shape = 's32[1]{0}', space=sflag, size = 0x4, scoped, tag = 'scoped memory for tpu_custom_call.1']
    #allocation7 [shape = 'u8[8192]{0}', space=vmem, size = 0x2000, scoped, tag = 'input window, operand 2']
    #allocation8 [shape = 'u8[8192]{0}', space=vmem, size = 0x2000, scoped, tag = 'output window, operand 0']
    %10 = vsyncpa [#allocation3], 0
    %s11 = scalar_lea.sflag [#allocation3], 1
    %12 = vsyncpa %s11, 0
    %13 = vsyncpa [#allocation6], 0
    %14 = vsyncpa [#allocation4], 0
    %s15 = scalar_lea.sflag [#allocation4], 1
    %16 = vsyncpa %s15, 0
    loop: start=0, step=1, limit=4
    $region2: #{tpu_custom_call.1} parent=1 // loop_pre_header
      _
    $region3: #{tpu_custom_call.1} parent=1 // loop_header
      %s18 = sphi 0, %s22
      %p19 = scmp.ge.s32.totalorder %s18, 4
      %s28 = sphi 0, %s30
      %s31 = sphi 0, %s28
      %s32 = sphi 0, %s31
      %s48 = sphi 0, %s32
      %s52 = sphi 0, %s52
      %s54 = sphi 0, %s52
      %s55 = sphi 0, %s54
      %s69 = sphi 0, %s55
      %s75 = sphi 0, %s77
      %s78 = sphi 0, %s75
      %s79 = sphi 0, %s78
      %s95 = sphi 0, %s79
      %s99 = sphi 0, %s99
      %s101 = sphi 0, %s99
      %s102 = sphi 0, %s101
      %s116 = sphi 0, %s102
      %s120 = sphi 0, %s120
      %s122 = sphi 0, %s120
      %s123 = sphi 0, %s122
      %s137 = sphi 0, %s123
      %s143 = sphi 0, %s145
      %s146 = sphi 0, %s143
      %s147 = sphi 0, %s146
      %s163 = sphi 0, %s147
    $region4: #{tpu_custom_call.1} parent=1 // loop_header_branch
      %21 = sbr.rel (%p19) target = $region8
    $region5: #{tpu_custom_call.1} parent=1 // loop_body
      %s23 = ssub.s32 %s18, 1
      %s24 = ssub.s32 %s18, 2
      %s25 = sadd.s32 %s18, 1
      %s26 = ssub.s32 %s18, %s25
      %p27 = scmp.eq.s32.totalorder %s26, 0
      %s29 = sadd.s32 %s28, 1
      %s30 = scalar_select %p27, %s28, %s29
      %p33 = pneg %p27
      %p34 = scmp.eq.s32.totalorder %s18, 1
      %p35 = por %p33, %p34
      %p36 = scmp.ne.s32.totalorder %s28, %s31
      %p37 = scmp.eq.s32.totalorder %s18, 0
      %p38 = por %p36, %p37
      %p39 = scmp.ne.s32.totalorder %s28, %s31
      %p40 = scmp.eq.s32.totalorder %s23, 1
      %p41 = por %p39, %p40
      %p42 = scmp.ne.s32.totalorder %s31, %s32
      %p43 = scmp.eq.s32.totalorder %s23, 0
      %p44 = por %p42, %p43
      %p45 = scmp.ne.s32.totalorder %s31, %s32
      %p46 = scmp.eq.s32.totalorder %s24, 1
      %p47 = por %p45, %p46
      %p49 = scmp.ne.s32.totalorder %s32, %s48
      %p50 = scmp.eq.s32.totalorder %s24, 0
      %p51 = por %p49, %p50
      %s53 = sadd.s32 %s52, 1
      %p56 = scmp.eq.s32.totalorder %s18, 1
      %p57 = scmp.ne.s32.totalorder %s52, %s54
      %p58 = scmp.eq.s32.totalorder %s18, 0
      %p59 = por %p57, %p58
      %p60 = scmp.ne.s32.totalorder %s52, %s54
      %p61 = scmp.eq.s32.totalorder %s23, 1
      %p62 = por %p60, %p61
      %p63 = scmp.ne.s32.totalorder %s54, %s55
      %p64 = scmp.eq.s32.totalorder %s23, 0
      %p65 = por %p63, %p64
      %p66 = scmp.ne.s32.totalorder %s54, %s55
      %p67 = scmp.eq.s32.totalorder %s24, 1
      %p68 = por %p66, %p67
      %p70 = scmp.ne.s32.totalorder %s55, %s69
      %p71 = scmp.eq.s32.totalorder %s24, 0
      %p72 = por %p70, %p71
      %s73 = ssub.s32 %s18, %s25
      %p74 = scmp.eq.s32.totalorder %s73, 0
      %s76 = sadd.s32 %s75, 1
      %s77 = scalar_select %p74, %s75, %s76
      %p80 = pneg %p74
      %p81 = scmp.eq.s32.totalorder %s18, 1
      %p82 = por %p80, %p81
      %p83 = scmp.ne.s32.totalorder %s75, %s78
      %p84 = scmp.eq.s32.totalorder %s18, 0
      %p85 = por %p83, %p84
      %p86 = scmp.ne.s32.totalorder %s75, %s78
      %p87 = scmp.eq.s32.totalorder %s23, 1
      %p88 = por %p86, %p87
      %p89 = scmp.ne.s32.totalorder %s78, %s79
      %p90 = scmp.eq.s32.totalorder %s23, 0
      %p91 = por %p89, %p90
      %p92 = scmp.ne.s32.totalorder %s78, %s79
      %p93 = scmp.eq.s32.totalorder %s24, 1
      %p94 = por %p92, %p93
      %p96 = scmp.ne.s32.totalorder %s79, %s95
      %p97 = scmp.eq.s32.totalorder %s24, 0
      %p98 = por %p96, %p97
      %s100 = sadd.s32 %s99, 1
      %p103 = scmp.eq.s32.totalorder %s18, 1
      %p104 = scmp.ne.s32.totalorder %s99, %s101
      %p105 = scmp.eq.s32.totalorder %s18, 0
      %p106 = por %p104, %p105
      %p107 = scmp.ne.s32.totalorder %s99, %s101
      %p108 = scmp.eq.s32.totalorder %s23, 1
      %p109 = por %p107, %p108
      %p110 = scmp.ne.s32.totalorder %s101, %s102
      %p111 = scmp.eq.s32.totalorder %s23, 0
      %p112 = por %p110, %p111
      %p113 = scmp.ne.s32.totalorder %s101, %s102
      %p114 = scmp.eq.s32.totalorder %s24, 1
      %p115 = por %p113, %p114
      %p117 = scmp.ne.s32.totalorder %s102, %s116
      %p118 = scmp.eq.s32.totalorder %s24, 0
      %p119 = por %p117, %p118
      %s121 = sadd.s32 %s120, 1
      %p124 = scmp.eq.s32.totalorder %s18, 1
      %p125 = scmp.ne.s32.totalorder %s120, %s122
      %p126 = scmp.eq.s32.totalorder %s18, 0
      %p127 = por %p125, %p126
      %p128 = scmp.ne.s32.totalorder %s120, %s122
      %p129 = scmp.eq.s32.totalorder %s23, 1
      %p130 = por %p128, %p129
      %p131 = scmp.ne.s32.totalorder %s122, %s123
      %p132 = scmp.eq.s32.totalorder %s23, 0
      %p133 = por %p131, %p132
      %p134 = scmp.ne.s32.totalorder %s122, %s123
      %p135 = scmp.eq.s32.totalorder %s24, 1
      %p136 = por %p134, %p135
      %p138 = scmp.ne.s32.totalorder %s123, %s137
      %p139 = scmp.eq.s32.totalorder %s24, 0
      %p140 = por %p138, %p139
      %s141 = ssub.s32 %s18, %s25
      %p142 = scmp.eq.s32.totalorder %s141, 0
      %s144 = sadd.s32 %s143, 1
      %s145 = scalar_select %p142, %s143, %s144
      %p148 = pneg %p142
      %p149 = scmp.eq.s32.totalorder %s18, 1
      %p150 = por %p148, %p149
      %p151 = scmp.ne.s32.totalorder %s143, %s146
      %p152 = scmp.eq.s32.totalorder %s18, 0
      %p153 = por %p151, %p152
      %p154 = scmp.ne.s32.totalorder %s143, %s146
      %p155 = scmp.eq.s32.totalorder %s23, 1
      %p156 = por %p154, %p155
      %p157 = scmp.ne.s32.totalorder %s146, %s147
      %p158 = scmp.eq.s32.totalorder %s23, 0
      %p159 = por %p157, %p158
      %p160 = scmp.ne.s32.totalorder %s146, %s147
      %p161 = scmp.eq.s32.totalorder %s24, 1
      %p162 = por %p160, %p161
      %p164 = scmp.ne.s32.totalorder %s147, %s163
      %p165 = scmp.eq.s32.totalorder %s24, 0
      %p166 = por %p164, %p165
      %p167 = scmp.le.s32.totalorder 1, %s18
      %p168 = scmp.lt.s32.totalorder %s18, 3
      %p169 = pnand %p167, %p168
      %p170 = pneg %p169
      // Predicated region
      $region9: #{tpu_custom_call.1} parent=5 // pred_check
        _
      $region10: #{tpu_custom_call.1} parent=5 // pred_check_branch
        %172 = sbr.rel (%p169) target = $region12
      $region11: #{tpu_custom_call.1} parent=5 // pred_region
        %s173 = ssub.s32 %s18, 1
        // Predicated region
        $region13: #{tpu_custom_call.1} parent=11 // pred_check
          %p174 = pneg %p65
        $region14: #{tpu_custom_call.1} parent=11 // pred_check_branch
          %176 = sbr.rel (%p174) target = $region16
        $region15: #{tpu_custom_call.1} parent=11 // pred_region
          %s178 = ssub.s32 2048, 2048
          %179 = vsyncadd [#allocation6], %s178
          %s180 = sshll.u32 [#allocation5], 4
          %s181 = int_to_ptr.vmem [resolvable:$true] %s180
          %186 = dma.hbm_to_vmem [thread:$0]  %s1, 2048, %s181, [#allocation6], 64, 64, 4
        $region16: #{tpu_custom_call.1} parent=11 // pred_fallthru
          _
        // Predicated region
        $region17: #{tpu_custom_call.1} parent=11 // pred_check
          %p187 = pneg %p112
        $region18: #{tpu_custom_call.1} parent=11 // pred_check_branch
          %189 = sbr.rel (%p187) target = $region20
        $region19: #{tpu_custom_call.1} parent=11 // pred_region
          _
        $region20: #{tpu_custom_call.1} parent=11 // pred_fallthru
          _
        // Predicated region
        $region21: #{tpu_custom_call.1} parent=11 // pred_check
          %p190 = pneg %p133
        $region22: #{tpu_custom_call.1} parent=11 // pred_check_branch
          %192 = sbr.rel (%p190) target = $region24
        $region23: #{tpu_custom_call.1} parent=11 // pred_region
          _
        $region24: #{tpu_custom_call.1} parent=11 // pred_fallthru
          _
      $region12: #{tpu_custom_call.1} parent=5 // pred_fallthru
        _
      %p193 = scmp.lt.s32.totalorder %s18, 2
      // Predicated region
      $region25: #{tpu_custom_call.1} parent=5 // pred_check
        %p194 = pneg %p193
      $region26: #{tpu_custom_call.1} parent=5 // pred_check_branch
        %196 = sbr.rel (%p194) target = $region28
      $region27: #{tpu_custom_call.1} parent=5 // pred_region
        // Predicated region
        $region29: #{tpu_custom_call.1} parent=27 // pred_check
          %p197 = pneg %p38
        $region30: #{tpu_custom_call.1} parent=27 // pred_check_branch
          %199 = sbr.rel (%p197) target = $region32
        $region31: #{tpu_custom_call.1} parent=27 // pred_region
          %s200 = sand.u32 %s18, 1
          %s201 = scalar_lea.sflag [#allocation3], %s200
          %s202 = sand.u32 %s28, 1
          %s203 = smul.addr %s202, 32
          %s204 = scalar_lea.vmem [#allocation2], %s203
          %s205 = smul.u32 2, %s18
          %s206 = ssub.s32 3, %s205
          %p207 = scmp.lt.s32.totalorder %s206, 2
          %s208 = scalar_select %p207, %s206, 2
          %s209 = smul.u32 128, %s208
          %s210 = smul.u32 %s209, 2
          %s212 = ssub.s32 512, %s210
          %213 = vsyncadd %s201, %s212
          %p214 = scmp.ne.s32.totalorder 0, %s210
          %s215 = smul.addr %s205, 2
          %s216 = smul.addr %s215, 128
          %s217 = scalar_lea.hbm %s0, %s216
          %s218 = smul.u32 16, %s208
          %s219 = sshll.u32 %s204, 4
          %s220 = int_to_ptr.vmem [resolvable:$true] %s219
          %s221 = sshll.u32 %s218, 4
          %225 = dma.hbm_to_vmem [thread:$0]  (%p214), %s217, %s221, %s220, %s201, 256, 256, 16
        $region32: #{tpu_custom_call.1} parent=27 // pred_fallthru
          _
        // Predicated region
        $region33: #{tpu_custom_call.1} parent=27 // pred_check
          %p226 = pneg %p85
        $region34: #{tpu_custom_call.1} parent=27 // pred_check_branch
          %228 = sbr.rel (%p226) target = $region36
        $region35: #{tpu_custom_call.1} parent=27 // pred_region
          %s229 = sand.u32 %s18, 1
          %s230 = scalar_lea.sflag [#allocation3], %s229
          %s231 = sand.u32 %s75, 1
          %s232 = smul.addr %s231, 8
          %s233 = scalar_lea.vmem [#allocation7], %s232
          %s234 = smul.u32 2, %s18
          %s235 = ssub.s32 3, %s234
          %p236 = scmp.lt.s32.totalorder %s235, 2
          %s237 = scalar_select %p236, %s235, 2
          %s238 = smul.u32 64, %s237
          %s240 = ssub.s32 128, %s238
          %241 = vsyncadd %s230, %s240
          %p242 = scmp.ne.s32.totalorder 0, %s238
          %s243 = smul.addr %s234, 64
          %s244 = scalar_lea.hbm %s2, %s243
          %s245 = smul.u32 4, %s237
          %s246 = sshll.u32 %s233, 4
          %s247 = int_to_ptr.vmem [resolvable:$true] %s246
          %s248 = sshll.u32 %s245, 4
          %252 = dma.hbm_to_vmem [thread:$0]  (%p242), %s244, %s248, %s247, %s230, 64, 64, 4
        $region36: #{tpu_custom_call.1} parent=27 // pred_fallthru
          _
      $region28: #{tpu_custom_call.1} parent=5 // pred_fallthru
        _
      %p253 = scmp.le.s32.totalorder 1, %s18
      %p254 = scmp.lt.s32.totalorder %s18, 3
      %p255 = pnand %p253, %p254
      %p256 = pneg %p255
      // Predicated region
      $region37: #{tpu_custom_call.1} parent=5 // pred_check
        _
      $region38: #{tpu_custom_call.1} parent=5 // pred_check_branch
        %258 = sbr.rel (%p255) target = $region40
      $region39: #{tpu_custom_call.1} parent=5 // pred_region
        %s259 = ssub.s32 %s18, 1
        %s260 = sand.u32 %s23, 1
        %s261 = scalar_lea.sflag [#allocation3], %s260
        %s262 = sand.u32 %s31, 1
        %s263 = smul.addr %s262, 32
        %s264 = scalar_lea.vmem [#allocation2], %s263
        // Predicated region
        $region41: #{tpu_custom_call.1} parent=39 // pred_check
          %p265 = pneg %p44
        $region42: #{tpu_custom_call.1} parent=39 // pred_check_branch
          %267 = sbr.rel (%p265) target = $region44
        $region43: #{tpu_custom_call.1} parent=39 // pred_region
          %268 = dma.done %s261, 512
        $region44: #{tpu_custom_call.1} parent=39 // pred_fallthru
          _
        // Predicated region
        $region45: #{tpu_custom_call.1} parent=39 // pred_check
          %p269 = pneg %p65
        $region46: #{tpu_custom_call.1} parent=39 // pred_check_branch
          %271 = sbr.rel (%p269) target = $region48
        $region47: #{tpu_custom_call.1} parent=39 // pred_region
          %272 = dma.done [#allocation6], 2048
        $region48: #{tpu_custom_call.1} parent=39 // pred_fallthru
          _
        %s273 = sand.u32 %s23, 1
        %s274 = scalar_lea.sflag [#allocation3], %s273
        %s275 = sand.u32 %s78, 1
        %s276 = smul.addr %s275, 8
        %s277 = scalar_lea.vmem [#allocation7], %s276
        // Predicated region
        $region49: #{tpu_custom_call.1} parent=39 // pred_check
          %p278 = pneg %p91
        $region50: #{tpu_custom_call.1} parent=39 // pred_check_branch
          %280 = sbr.rel (%p278) target = $region52
        $region51: #{tpu_custom_call.1} parent=39 // pred_region
          %281 = dma.done %s274, 128
        $region52: #{tpu_custom_call.1} parent=39 // pred_fallthru
          _
        %s282 = sand.u32 %s23, 1
        %s283 = scalar_lea.sflag [#allocation3], %s282
        %s284 = sand.u32 %s31, 1
        %s285 = smul.addr %s284, 32
        %s286 = scalar_lea.vmem [#allocation2], %s285
        %p287 = pneg %p44
        %p288 = pneg %p41
        %p289 = pneg %p65
        %p290 = pneg %p62
        %s291 = sand.u32 %s23, 1
        %s292 = scalar_lea.sflag [#allocation3], %s291
        %s293 = sand.u32 %s78, 1
        %s294 = smul.addr %s293, 8
        %s295 = scalar_lea.vmem [#allocation7], %s294
        %p296 = pneg %p91
        %p297 = pneg %p88
        %p298 = pneg %p112
        %p299 = pneg %p109
        %p300 = pneg %p133
        %p301 = pneg %p130
        %p302 = pneg %p159
        %p303 = pneg %p156
        %s304 = sand.u32 %s146, 1
        %s305 = scalar_lea.sflag [#allocation4], %s304
        %s306 = sand.u32 %s146, 1
        %s307 = smul.addr %s306, 8
        %s308 = scalar_lea.vmem [#allocation8], %s307
        %s309 = smul.u32 2, %s23
        %s310 = ssub.s32 3, %s309
        %p311 = scmp.lt.s32.totalorder %s310, 2
        %s312 = scalar_select %p311, %s310, 2
        %s313 = smul.u32 128, %s312
        %s314 = smul.u32 %s313, 2
        %s315 = smul.u32 2, %s23
        %s316 = ssub.s32 3, %s315
        %p317 = scmp.lt.s32.totalorder %s316, 2
        %s318 = scalar_select %p317, %s316, 2
        %s319 = smul.u32 64, %s318
        %s320 = smul.u32 2, %s23
        %s321 = ssub.s32 3, %s320
        %p322 = scmp.lt.s32.totalorder %s321, 2
        %s323 = scalar_select %p322, %s321, 2
        %s324 = smul.u32 64, %s323
        %v326 = vld [vmem:[%s264] sm:$0xff]
        %v327 = vld [vmem:[%s264 + $0x8] sm:$0xff]
        %v328 = vld [vmem:[%s264 + $0x10] sm:$0xff]
        %v329 = vld [vmem:[%s264 + $0x18] sm:$0xff]
        %v330 = vpack.c.bf16 %v328, %v326
        %v331 = vpack.c.bf16 %v329, %v327
        %v332 = vld [vmem:[#allocation5] sm:$0xf]
        %v333 = vld [vmem:[#allocation5 + $0x4] sm:$0xf]
        %v334 = vld [vmem:[#allocation5 + $0x8] sm:$0xf]
        %v335 = vld [vmem:[#allocation5 + $0xc] sm:$0xf]
        %v336 = vld [vmem:[#allocation5 + $0x10] sm:$0xf]
        %v337 = vld [vmem:[#allocation5 + $0x14] sm:$0xf]
        %v338 = vld [vmem:[#allocation5 + $0x18] sm:$0xf]
        %v339 = vld [vmem:[#allocation5 + $0x1c] sm:$0xf]
        %v340 = vld [vmem:[#allocation5 + $0x20] sm:$0xf]
        %v341 = vld [vmem:[#allocation5 + $0x24] sm:$0xf]
        %v342 = vld [vmem:[#allocation5 + $0x28] sm:$0xf]
        %v343 = vld [vmem:[#allocation5 + $0x2c] sm:$0xf]
        %v344 = vld [vmem:[#allocation5 + $0x30] sm:$0xf]
        %v345 = vld [vmem:[#allocation5 + $0x34] sm:$0xf]
        %v346 = vld [vmem:[#allocation5 + $0x38] sm:$0xf]
        %v347 = vld [vmem:[#allocation5 + $0x3c] sm:$0xf]
        %v348 = vld [vmem:[#allocation5 + $0x40] sm:$0xf]
        %v349 = vld [vmem:[#allocation5 + $0x44] sm:$0xf]
        %v350 = vld [vmem:[#allocation5 + $0x48] sm:$0xf]
        %v351 = vld [vmem:[#allocation5 + $0x4c] sm:$0xf]
        %v352 = vld [vmem:[#allocation5 + $0x50] sm:$0xf]
        %v353 = vld [vmem:[#allocation5 + $0x54] sm:$0xf]
        %v354 = vld [vmem:[#allocation5 + $0x58] sm:$0xf]
        %v355 = vld [vmem:[#allocation5 + $0x5c] sm:$0xf]
        %v356 = vld [vmem:[#allocation5 + $0x60] sm:$0xf]
        %v357 = vld [vmem:[#allocation5 + $0x64] sm:$0xf]
        %v358 = vld [vmem:[#allocation5 + $0x68] sm:$0xf]
        %v359 = vld [vmem:[#allocation5 + $0x6c] sm:$0xf]
        %v360 = vld [vmem:[#allocation5 + $0x70] sm:$0xf]
        %v361 = vld [vmem:[#allocation5 + $0x74] sm:$0xf]
        %v362 = vld [vmem:[#allocation5 + $0x78] sm:$0xf]
        %v363 = vld [vmem:[#allocation5 + $0x7c] sm:$0xf]
        %v364 = vld [vmem:[%s277] sm:$0xf]
        %v365 = vld [vmem:[%s277 + $0x4] sm:$0xf]
        %v366 = vunpack.c.l.bf16 %v364
        %v367 = vunpack.c.l.bf16 %v365
        %v400 = vunpack.c.l.b16 %v332
        %v401 = vunpack.c.l.b16 %v333
        %v402 = vunpack.c.l.b16 %v334
        %v403 = vunpack.c.l.b16 %v335
        %v404 = vunpack.c.l.b16 %v336
        %v405 = vunpack.c.l.b16 %v337
        %v406 = vunpack.c.l.b16 %v338
        %v407 = vunpack.c.l.b16 %v339
        %v408 = vunpack.c.l.b16 %v340
        %v409 = vunpack.c.l.b16 %v341
        %v410 = vunpack.c.l.b16 %v342
        %v411 = vunpack.c.l.b16 %v343
        %v412 = vunpack.c.l.b16 %v344
        %v413 = vunpack.c.l.b16 %v345
        %v414 = vunpack.c.l.b16 %v346
        %v415 = vunpack.c.l.b16 %v347
        %v416 = vunpack.c.l.b16 %v348
        %v417 = vunpack.c.l.b16 %v349
        %v418 = vunpack.c.l.b16 %v350
        %v419 = vunpack.c.l.b16 %v351
        %v420 = vunpack.c.l.b16 %v352
        %v421 = vunpack.c.l.b16 %v353
        %v422 = vunpack.c.l.b16 %v354
        %v423 = vunpack.c.l.b16 %v355
        %v424 = vunpack.c.l.b16 %v356
        %v425 = vunpack.c.l.b16 %v357
        %v426 = vunpack.c.l.b16 %v358
        %v427 = vunpack.c.l.b16 %v359
        %v428 = vunpack.c.l.b16 %v360
        %v429 = vunpack.c.l.b16 %v361
        %v430 = vunpack.c.l.b16 %v362
        %v431 = vunpack.c.l.b16 %v363
        %v432 = vpack.c.b16 %v401, %v400
        %v433 = vpack.c.b16 %v403, %v402
        %v434 = vpack.c.b16 %v405, %v404
        %v435 = vpack.c.b16 %v407, %v406
        %v436 = vpack.c.b16 %v409, %v408
        %v437 = vpack.c.b16 %v411, %v410
        %v438 = vpack.c.b16 %v413, %v412
        %v439 = vpack.c.b16 %v415, %v414
        %v440 = vpack.c.b16 %v417, %v416
        %v441 = vpack.c.b16 %v419, %v418
        %v442 = vpack.c.b16 %v421, %v420
        %v443 = vpack.c.b16 %v423, %v422
        %v444 = vpack.c.b16 %v425, %v424
        %v445 = vpack.c.b16 %v427, %v426
        %v446 = vpack.c.b16 %v429, %v428
        %v447 = vpack.c.b16 %v431, %v430
        %464 = vmatprep.subr.bf16.mxu0 0
        %465 = vmatpush1.bf16.msra.mxu0 %v432
        %466 = vmatprep.subr.bf16.mxu0 0
        %467 = vmatpush1.bf16.msra.mxu0 %v433
        %468 = vmatprep.subr.bf16.mxu0 0
        %469 = vmatpush1.bf16.msra.mxu0 %v434
        %470 = vmatprep.subr.bf16.mxu0 0
        %471 = vmatpush1.bf16.msra.mxu0 %v435
        %472 = vmatprep.subr.bf16.mxu0 0
        %473 = vmatpush1.bf16.msra.mxu0 %v436
        %474 = vmatprep.subr.bf16.mxu0 0
        %475 = vmatpush1.bf16.msra.mxu0 %v437
        %476 = vmatprep.subr.bf16.mxu0 0
        %477 = vmatpush1.bf16.msra.mxu0 %v438
        %478 = vmatprep.subr.bf16.mxu0 0
        %479 = vmatpush1.bf16.msra.mxu0 %v439
        %480 = vmatprep.subr.bf16.mxu0 0
        %481 = vmatpush1.bf16.msra.mxu0 %v440
        %482 = vmatprep.subr.bf16.mxu0 0
        %483 = vmatpush1.bf16.msra.mxu0 %v441
        %484 = vmatprep.subr.bf16.mxu0 0
        %485 = vmatpush1.bf16.msra.mxu0 %v442
        %486 = vmatprep.subr.bf16.mxu0 0
        %487 = vmatpush1.bf16.msra.mxu0 %v443
        %488 = vmatprep.subr.bf16.mxu0 0
        %489 = vmatpush1.bf16.msra.mxu0 %v444
        %490 = vmatprep.subr.bf16.mxu0 0
        %491 = vmatpush1.bf16.msra.mxu0 %v445
        %492 = vmatprep.subr.bf16.mxu0 0
        %493 = vmatpush1.bf16.msra.mxu0 %v446
        %494 = vmatprep.subr.bf16.mxu0 0
        %495 = vmatpush1.bf16.msra.mxu0 %v447
        %496 = vmatprep.mubr.bf16.mxu0 %v331
        %497 = vmatmul.mubr.bf16.gmra.mrb[0].mxu0 %v330
        %v498 = vpop.f32.mrb[0].mxu0
        %v499 = vadd.f32 %v366, %v498
        %v500 = vpop.f32.mrb[0].mxu0
        %v501 = vpop.f32.mrb[0].mxu0
        %v502 = vadd.f32 %v367, %v501
        %v503 = vpop.f32.mrb[0].mxu0
        %504 = vdwg.mxu0
        %505 = vadd.xlane.f32.xlu0 %v499
        %v506 = vpop.xlane.xlu0 %505
        %507 = vadd.xlane.f32.xlu0 %v502
        %v508 = vpop.xlane.xlu0 %507
        %v509 = vmul.f32 %v506, 0.0078125
        %v510 = vmul.f32 %v508, 0.0078125
        %v511 = vsub.f32 %v499, %v509
        %v512 = vsub.f32 %v502, %v510
        %v513 = vmul.f32 %v511, %v511
        %v514 = vmul.f32 %v512, %v512
        %515 = vadd.xlane.f32.xlu0 %v513
        %v516 = vpop.xlane.xlu0 %515
        %517 = vadd.xlane.f32.xlu0 %v514
        %v518 = vpop.xlane.xlu0 %517
        %v519 = vmul.f32 %v516, 0.0078125
        %v520 = vmul.f32 %v518, 0.0078125
        %v521 = vadd.f32 %v519, 1e-12
        %v522 = vadd.f32 %v520, 1e-12
        %v523 = vrsqrt.pop %v521
        %v524 = vrsqrt.pop %v522
        %v525 = vmul.f32 %v511, %v523
        %v526 = vmul.f32 %v512, %v524
        %v527 = vpack.c.bf16 %v526, %v525
        %v528 = vld [vmem:[%s3] sm:$0x1]
        %v530 = vpack.i.b16 %v528, %v528
        %v532 = vlaneseq
        %v533 = vshrl.u32 %v532, 7
        %v534 = vsub.s32 0, %v533
        %v535 = vrot.slane %v530, %v534
        %v536 = vmul.bf16 %v527, %v535
        %v537 = vld [vmem:[%s4] sm:$0x1]
        %v539 = vpack.i.b16 %v537, %v537
        %v541 = vlaneseq
        %v542 = vshrl.u32 %v541, 7
        %v543 = vsub.s32 0, %v542
        %v544 = vrot.slane %v539, %v543
        %v545 = vadd.bf16 %v536, %v544
        %v547 = vunpack.c.l.b16 %v545
        %v548 = vunpack.c.h.b16 %v545
        %v549 = vpack.c.b16 %v547, %v547
        %v550 = vpack.c.b16 %v548, %v548
        %553 = vst [vmem:[%s308] sm:$0xf] %v549
        %554 = vst [vmem:[%s308 + $0x4] sm:$0xf] %v550
        %s555 = sand.u32 %s146, 1
        %s556 = scalar_lea.sflag [#allocation4], %s555
        %s557 = sand.u32 %s146, 1
        %s558 = smul.addr %s557, 8
        %s559 = scalar_lea.vmem [#allocation8], %s558
        // Predicated region
        $region53: #{tpu_custom_call.1} parent=39 // pred_check
          %p560 = pneg %p156
        $region54: #{tpu_custom_call.1} parent=39 // pred_check_branch
          %562 = sbr.rel (%p560) target = $region56
        $region55: #{tpu_custom_call.1} parent=39 // pred_region
          %s563 = smul.u32 2, %s23
          %s564 = ssub.s32 3, %s563
          %p565 = scmp.lt.s32.totalorder %s564, 2
          %s566 = scalar_select %p565, %s564, 2
          %s567 = smul.u32 64, %s566
          %s569 = ssub.s32 128, %s567
          %570 = vsyncadd %s556, %s569
          %p571 = scmp.ne.s32.totalorder 0, %s567
          %s572 = smul.addr %s563, 64
          %s573 = scalar_lea.hbm %s5, %s572
          %s574 = smul.u32 4, %s566
          %s575 = sshll.u32 %s559, 4
          %s576 = int_to_ptr.vmem [resolvable:$true] %s575
          %s577 = sshll.u32 %s574, 4
          %581 = dma.vmem_to_hbm [thread:$0]  (%p571), %s576, %s577, %s573, %s556, 64, 64, 4
        $region56: #{tpu_custom_call.1} parent=39 // pred_fallthru
          _
      $region40: #{tpu_custom_call.1} parent=5 // pred_fallthru
        _
      %p582 = scmp.le.s32.totalorder 2, %s18
      // Predicated region
      $region57: #{tpu_custom_call.1} parent=5 // pred_check
        %p583 = pneg %p582
      $region58: #{tpu_custom_call.1} parent=5 // pred_check_branch
        %585 = sbr.rel (%p583) target = $region60
      $region59: #{tpu_custom_call.1} parent=5 // pred_region
        %s586 = ssub.s32 %s18, 2
        // Predicated region
        $region61: #{tpu_custom_call.1} parent=59 // pred_check
          %p587 = pneg %p162
        $region62: #{tpu_custom_call.1} parent=59 // pred_check_branch
          %589 = sbr.rel (%p587) target = $region64
        $region63: #{tpu_custom_call.1} parent=59 // pred_region
          %s590 = sand.u32 %s147, 1
          %s591 = scalar_lea.sflag [#allocation4], %s590
          %s592 = sand.u32 %s147, 1
          %s593 = smul.addr %s592, 8
          %s594 = scalar_lea.vmem [#allocation8], %s593
          %595 = dma.done %s591, 128
        $region64: #{tpu_custom_call.1} parent=59 // pred_fallthru
          _
      $region60: #{tpu_custom_call.1} parent=5 // pred_fallthru
        _
    $region6: #{tpu_custom_call.1} parent=1 // loop_footer
      %s22 = sadd.s32 1, %s18
    $region7: #{tpu_custom_call.1} parent=1 // loop_footer_branch
      %17 = sbr.rel target = $region3
    $region8: #{tpu_custom_call.1} parent=1 // loop_exit
      _
    %596 = vsyncpa [#allocation3], 1
    %s597 = scalar_lea.sflag [#allocation3], 1
    %598 = vsyncpa %s597, 1
    %599 = vsyncpa [#allocation6], 1
    %600 = vsyncpa [#allocation4], 1
    %s601 = scalar_lea.sflag [#allocation4], 1
    %602 = vsyncpa %s601, 1

</llo_original>
